<compile_context>
chip_gen: v6e
topology: v6e:2x2x1
jax: 0.10.0
libtpu: 0.0.40
codegen_flags: <defaults>
</compile_context>

<pallas_src>
import functools

import jax
import jax.numpy as jnp
from jax import lax
from jax.experimental import pallas as pl
from jax.experimental.pallas import tpu as pltpu


NEG_SLOPE = 0.2
BN_EPS = 1e-5


def _pass1_kernel(xt_ref, w_ref, b_ref, a_ref, stats_ref, *, dilation, tile):
    """Fused (conv2 o conv1) + residual + leaky_relu + per-tile BN partial sums.

    xt_ref:    (1, 1, C, tile + 2d)  one sequence's time tile with a halo of d on each side
    w_ref:     (C, 3C)               folded weights, taps ordered [t-d, t, t+d]
    b_ref:     (C, 1)                folded bias
    a_ref:     (1, 1, C, tile)       activation output
    stats_ref: (1, 1, C, 2)          per-tile [sum(a), sum(a*a)] per channel
    """
    d = dilation
    xt = xt_ref[0, 0]                                   # (C, tile + 2d)

    # dilated k=3 taps (static slices of the halo'd tile)
    xm = xt[:, 0:tile]                                  # x[t - d]
    x0 = xt[:, d:d + tile]                              # x[t]
    xp = xt[:, 2 * d:2 * d + tile]                      # x[t + d]
    xs = jnp.concatenate([xm, x0, xp], axis=0)          # (3C, tile)

    # conv2(conv1(x)) folded into a single stacked matmul (one MXU push)
    y = jnp.dot(w_ref[...], xs, preferred_element_type=jnp.float32) + b_ref[...]

    # residual + leaky_relu(0.2) as a single max
    r = y + x0
    a = jnp.maximum(r, NEG_SLOPE * r)

    a_ref[0, 0] = a
    s1 = jnp.sum(a, axis=1, keepdims=True)              # (C, 1)
    s2 = jnp.sum(a * a, axis=1, keepdims=True)          # (C, 1)
    stats_ref[0, 0] = jnp.concatenate([s1, s2], axis=1)  # (C, 2)


def _pass2_kernel(a_ref, scale_ref, shift_ref, o_ref):
    """Folded BatchNorm affine:  out = a * scale + shift  (one mul + one add / element)."""
    o_ref[0, 0] = a_ref[0, 0] * scale_ref[...] + shift_ref[...]


def _choose_time_tile(T, target=512):
    """Largest divisor of T that is <= target (so tiles are lane-dense and exact)."""
    if T <= target:
        return T
    for tt in range(target, 0, -1):
        if T % tt == 0:
            return tt
    return T


def block_forward(x, params, dilation):
    """x: (N, C, T) float32 (PyTorch NCT layout).  Returns (N, C, T) float32."""
    N, C, T = x.shape
    d = dilation
    w1, b1, w2, b2, gamma, beta = params

    # ---- fold conv2 into conv1 (plain JAX, O(C^3), once) -----------------------------
    w2m = w2[:, :, 0]                                          # (C_out, C_in)
    w_eff = jnp.concatenate(
        [w2m @ w1[:, :, k] for k in range(3)], axis=1)         # (C, 3C)
    b_eff = (w2m @ b1 + b2).reshape(C, 1)                      # (C, 1)

    # ---- one padded copy of x, overlapping time tiles with a 2d halo -----------------
    TT = _choose_time_tile(T)
    num_t = T // TT
    x_pad = jnp.pad(x, ((0, 0), (0, 0), (d, d)))               # (N, C, T + 2d)
    cols = (jnp.arange(num_t) * TT)[:, None] + jnp.arange(TT + 2 * d)[None, :]
    x_tiles = x_pad[:, :, cols]                                # (N, C, num_t, TT + 2d)
    x_tiles = jnp.transpose(x_tiles, (0, 2, 1, 3))             # (N, num_t, C, TT + 2d)

    # ---- pass 1: conv + residual + leaky_relu + BN partial sums ----------------------
    kernel1 = functools.partial(_pass1_kernel, dilation=d, tile=TT)
    a_tiles, stats = pl.pallas_call(
        kernel1,
        out_shape=(
            jax.ShapeDtypeStruct((N, num_t, C, TT), jnp.float32),
            jax.ShapeDtypeStruct((N, num_t, C, 2), jnp.float32),
        ),
        grid=(N, num_t),
        in_specs=[
            pl.BlockSpec((1, 1, C, TT + 2 * d), lambda n, j: (n, j, 0, 0)),
            pl.BlockSpec((C, 3 * C), lambda n, j: (0, 0)),
            pl.BlockSpec((C, 1), lambda n, j: (0, 0)),
        ],
        out_specs=(
            pl.BlockSpec((1, 1, C, TT), lambda n, j: (n, j, 0, 0)),
            pl.BlockSpec((1, 1, C, 2), lambda n, j: (n, j, 0, 0)),
        ),
        compiler_params=pltpu.CompilerParams(
            dimension_semantics=("parallel", "parallel")),
    )(x_tiles, w_eff, b_eff)

    # ---- tiny global BN reduction + affine fold (plain JAX, (C,)-sized) --------------
    nt = N * T
    sums = jnp.sum(stats, axis=(0, 1))                         # (C, 2)
    mean = sums[:, 0] / nt
    var = jnp.maximum(sums[:, 1] / nt - mean * mean, 0.0)      # biased variance (training BN)
    inv = lax.rsqrt(var + BN_EPS)
    scale = (gamma * inv).reshape(C, 1)
    shift = (beta - mean * gamma * inv).reshape(C, 1)

    # ---- pass 2: apply folded BN affine ----------------------------------------------
    out_tiles = pl.pallas_call(
        _pass2_kernel,
        out_shape=jax.ShapeDtypeStruct((N, num_t, C, TT), jnp.float32),
        grid=(N, num_t),
        in_specs=[
            pl.BlockSpec((1, 1, C, TT), lambda n, j: (n, j, 0, 0)),
            pl.BlockSpec((C, 1), lambda n, j: (0, 0)),
            pl.BlockSpec((C, 1), lambda n, j: (0, 0)),
        ],
        out_specs=pl.BlockSpec((1, 1, C, TT), lambda n, j: (n, j, 0, 0)),
        compiler_params=pltpu.CompilerParams(
            dimension_semantics=("parallel", "parallel")),
    )(a_tiles, scale, shift)

    # (N, num_t, C, TT) -> (N, C, T)
    return jnp.transpose(out_tiles, (0, 2, 1, 3)).reshape(N, C, T)


def block_reference(x, params, dilation):
    """Pure-JAX reference with identical semantics (for the correctness check)."""
    w1, b1, w2, b2, gamma, beta = params
    d = dilation
    y1 = lax.conv_general_dilated(
        x, w1, window_strides=(1,), padding=[(d, d)], rhs_dilation=(d,),
        dimension_numbers=("NCH", "OIH", "NCH")) + b1[None, :, None]
    y2 = lax.conv_general_dilated(
        y1, w2, window_strides=(1,), padding=[(0, 0)],
        dimension_numbers=("NCH", "OIH", "NCH")) + b2[None, :, None]
    r = y2 + x
    a = jnp.where(r >= 0, r, NEG_SLOPE * r)
    mean = jnp.mean(a, axis=(0, 2), keepdims=True)
    var = jnp.mean((a - mean) ** 2, axis=(0, 2), keepdims=True)
    xhat = (a - mean) * lax.rsqrt(var + BN_EPS)
    return gamma[None, :, None] * xhat + beta[None, :, None]


def init_params(key, channels):
    k1, k2, k3, k4 = jax.random.split(key, 4)
    w1 = 0.1 * jax.random.normal(k1, (channels, channels, 3), jnp.float32)  # (O, I, K)
    b1 = 0.1 * jax.random.normal(k2, (channels,), jnp.float32)
    w2 = 0.1 * jax.random.normal(k3, (channels, channels, 1), jnp.float32)
    b2 = 0.1 * jax.random.normal(k4, (channels,), jnp.float32)
    gamma = jnp.ones((channels,), jnp.float32)   # BatchNorm1d default affine init
    beta = jnp.zeros((channels,), jnp.float32)
    return (w1, b1, w2, b2, gamma, beta)


if __name__ == "__main__":
    N, C, T, DIL = 2, 8, 128, 2
    key = jax.random.PRNGKey(0)
    kx, kp = jax.random.split(key)
    x = jax.random.normal(kx, (N, C, T), jnp.float32)
    params = init_params(kp, C)

    fwd = jax.jit(lambda xx, pp: block_forward(xx, pp, DIL))
    out = jax.block_until_ready(fwd(x, params))
    ref = jax.block_until_ready(block_reference(x, params, DIL))

    assert out.shape == (N, C, T)
    assert jnp.max(jnp.abs(out - ref)) < 1e-3, "mismatch vs pure-JAX reference"
    print("KERNEL_OK")
</pallas_src>

<mosaic_0001>
module attributes {stable_mosaic.version = 11 : i64} {
  func.func @_pass1_kernel(%arg0: i32, %arg1: i32, %arg2: memref<1x1x8x132xf32, #tpu.memory_space<vmem>>, %arg3: memref<8x24xf32, #tpu.memory_space<vmem>>, %arg4: memref<8x1xf32, #tpu.memory_space<vmem>>, %arg5: memref<1x1x8x128xf32, #tpu.memory_space<vmem>>, %arg6: memref<1x1x8x2xf32, #tpu.memory_space<vmem>>) attributes {dimension_semantics = [#tpu.dimension_semantics<parallel>, #tpu.dimension_semantics<parallel>], iteration_bounds = array<i64: 2, 1>, scalar_prefetch = 0 : i64, scratch_operands = 0 : i64, tpu.core_type = #tpu.core_type<tc>, window_params = [{transform_indices = @transform_0, window_bounds = array<i64: 1, 1, 8, 132>}, {pipeline_mode = #tpu.pipeline_mode<synchronous>, transform_indices = @transform_1, window_bounds = array<i64: 8, 24>}, {pipeline_mode = #tpu.pipeline_mode<synchronous>, transform_indices = @transform_2, window_bounds = array<i64: 8, 1>}, {transform_indices = @transform_3, window_bounds = array<i64: 1, 1, 8, 128>}, {transform_indices = @transform_4, window_bounds = array<i64: 1, 1, 8, 2>}]} {
    %c0 = arith.constant 0 : index
    %c0_0 = arith.constant 0 : index
    %c0_1 = arith.constant 0 : index
    %c0_2 = arith.constant 0 : index
    %0 = vector.load %arg2[%c0, %c0_0, %c0_1, %c0_2] : memref<1x1x8x132xf32, #tpu.memory_space<vmem>>, vector<1x1x8x132xf32>
    %1 = vector.shape_cast %0 : vector<1x1x8x132xf32> to vector<8x132xf32>
    %2 = vector.extract_strided_slice %1 {offsets = [0, 0], sizes = [8, 128], strides = [1, 1]} : vector<8x132xf32> to vector<8x128xf32>
    %3 = vector.extract_strided_slice %1 {offsets = [0, 2], sizes = [8, 128], strides = [1, 1]} : vector<8x132xf32> to vector<8x128xf32>
    %4 = vector.extract_strided_slice %1 {offsets = [0, 4], sizes = [8, 128], strides = [1, 1]} : vector<8x132xf32> to vector<8x128xf32>
    %5 = tpu.concatenate %2, %3, %4 in 0 : vector<8x128xf32>, vector<8x128xf32>, vector<8x128xf32> -> vector<24x128xf32>
    %c0_3 = arith.constant 0 : index
    %c0_4 = arith.constant 0 : index
    %6 = vector.load %arg3[%c0_3, %c0_4] : memref<8x24xf32, #tpu.memory_space<vmem>>, vector<8x24xf32>
    %cst = arith.constant dense<0.000000e+00> : vector<8x128xf32>
    %7 = tpu.matmul %6, %5, %cst {dimension_numbers = #tpu.dot_dimension_numbers<[1], [0], [0], [1], [0, 0, 1, 1], [], []>} : vector<8x24xf32>, vector<24x128xf32>, vector<8x128xf32> -> vector<8x128xf32>
    %c0_5 = arith.constant 0 : index
    %c0_6 = arith.constant 0 : index
    %8 = vector.load %arg4[%c0_5, %c0_6] : memref<8x1xf32, #tpu.memory_space<vmem>>, vector<8x1xf32>
    %9 = vector.broadcast %8 : vector<8x1xf32> to vector<8x128xf32>
    %10 = arith.addf %7, %9 : vector<8x128xf32>
    %11 = arith.addf %10, %3 : vector<8x128xf32>
    %cst_7 = arith.constant 2.000000e-01 : f32
    %12 = vector.broadcast %cst_7 : f32 to vector<8x128xf32>
    %13 = arith.mulf %12, %11 : vector<8x128xf32>
    %14 = arith.maximumf %11, %13 : vector<8x128xf32>
    %c0_8 = arith.constant 0 : index
    %c0_9 = arith.constant 0 : index
    %c0_10 = arith.constant 0 : index
    %c0_11 = arith.constant 0 : index
    %15 = vector.load %arg5[%c0_8, %c0_9, %c0_10, %c0_11] : memref<1x1x8x128xf32, #tpu.memory_space<vmem>>, vector<1x1x8x128xf32>
    %16 = vector.shape_cast %15 : vector<1x1x8x128xf32> to vector<8x128xf32>
    %17 = vector.shape_cast %14 : vector<8x128xf32> to vector<1x1x8x128xf32>
    tpu.vector_store %arg5[%c0_8, %c0_9, %c0_10, %c0_11], %17 {strides = array<i32>} : memref<1x1x8x128xf32, #tpu.memory_space<vmem>>, vector<1x1x8x128xf32>,
    %cst_12 = arith.constant dense<0.000000e+00> : vector<8xf32>
    %18 = vector.multi_reduction <add>, %14, %cst_12 [1] : vector<8x128xf32> to vector<8xf32>
    %19 = vector.shape_cast %18 : vector<8xf32> to vector<8x1xf32>
    %20 = arith.mulf %14, %14 : vector<8x128xf32>
    %cst_13 = arith.constant dense<0.000000e+00> : vector<8xf32>
    %21 = vector.multi_reduction <add>, %20, %cst_13 [1] : vector<8x128xf32> to vector<8xf32>
    %22 = vector.shape_cast %21 : vector<8xf32> to vector<8x1xf32>
    %23 = tpu.concatenate %19, %22 in 1 : vector<8x1xf32>, vector<8x1xf32> -> vector<8x2xf32>
    %c0_14 = arith.constant 0 : index
    %c0_15 = arith.constant 0 : index
    %c0_16 = arith.constant 0 : index
    %c0_17 = arith.constant 0 : index
    %24 = vector.load %arg6[%c0_14, %c0_15, %c0_16, %c0_17] : memref<1x1x8x2xf32, #tpu.memory_space<vmem>>, vector<1x1x8x2xf32>
    %25 = vector.shape_cast %24 : vector<1x1x8x2xf32> to vector<8x2xf32>
    %26 = vector.shape_cast %23 : vector<8x2xf32> to vector<1x1x8x2xf32>
    tpu.vector_store %arg6[%c0_14, %c0_15, %c0_16, %c0_17], %26 {strides = array<i32>} : memref<1x1x8x2xf32, #tpu.memory_space<vmem>>, vector<1x1x8x2xf32>,
    return
  }
  func.func @transform_0(%arg0: i32, %arg1: i32) -> (i32, i32, i32, i32) {
    %c0_i32 = arith.constant 0 : i32
    %c0_i32_0 = arith.constant 0 : i32
    %c0_i32_1 = arith.constant 0 : i32
    return %arg0, %arg1, %c0_i32, %c0_i32_0 : i32, i32, i32, i32
  }
  func.func @transform_1(%arg0: i32, %arg1: i32) -> (i32, i32) {
    %c0_i32 = arith.constant 0 : i32
    %c0_i32_0 = arith.constant 0 : i32
    %c0_i32_1 = arith.constant 0 : i32
    return %c0_i32, %c0_i32_0 : i32, i32
  }
  func.func @transform_2(%arg0: i32, %arg1: i32) -> (i32, i32) {
    %c0_i32 = arith.constant 0 : i32
    %c0_i32_0 = arith.constant 0 : i32
    %c0_i32_1 = arith.constant 0 : i32
    return %c0_i32, %c0_i32_0 : i32, i32
  }
  func.func @transform_3(%arg0: i32, %arg1: i32) -> (i32, i32, i32, i32) {
    %c0_i32 = arith.constant 0 : i32
    %c0_i32_0 = arith.constant 0 : i32
    %c0_i32_1 = arith.constant 0 : i32
    return %arg0, %arg1, %c0_i32, %c0_i32_0 : i32, i32, i32, i32
  }
  func.func @transform_4(%arg0: i32, %arg1: i32) -> (i32, i32, i32, i32) {
    %c0_i32 = arith.constant 0 : i32
    %c0_i32_0 = arith.constant 0 : i32
    %c0_i32_1 = arith.constant 0 : i32
    return %arg0, %arg1, %c0_i32, %c0_i32_0 : i32, i32, i32, i32
  }
}

module attributes {stable_mosaic.version = 11 : i64} {
  func.func @_pass2_kernel(%arg0: i32, %arg1: i32, %arg2: memref<1x1x8x128xf32, #tpu.memory_space<vmem>>, %arg3: memref<8x1xf32, #tpu.memory_space<vmem>>, %arg4: memref<8x1xf32, #tpu.memory_space<vmem>>, %arg5: memref<1x1x8x128xf32, #tpu.memory_space<vmem>>) attributes {dimension_semantics = [#tpu.dimension_semantics<parallel>, #tpu.dimension_semantics<parallel>], iteration_bounds = array<i64: 2, 1>, scalar_prefetch = 0 : i64, scratch_operands = 0 : i64, tpu.core_type = #tpu.core_type<tc>, window_params = [{transform_indices = @transform_0, window_bounds = array<i64: 1, 1, 8, 128>}, {pipeline_mode = #tpu.pipeline_mode<synchronous>, transform_indices = @transform_1, window_bounds = array<i64: 8, 1>}, {pipeline_mode = #tpu.pipeline_mode<synchronous>, transform_indices = @transform_2, window_bounds = array<i64: 8, 1>}, {transform_indices = @transform_3, window_bounds = array<i64: 1, 1, 8, 128>}]} {
    %c0 = arith.constant 0 : index
    %c0_0 = arith.constant 0 : index
    %c0_1 = arith.constant 0 : index
    %c0_2 = arith.constant 0 : index
    %0 = vector.load %arg2[%c0, %c0_0, %c0_1, %c0_2] : memref<1x1x8x128xf32, #tpu.memory_space<vmem>>, vector<1x1x8x128xf32>
    %1 = vector.shape_cast %0 : vector<1x1x8x128xf32> to vector<8x128xf32>
    %c0_3 = arith.constant 0 : index
    %c0_4 = arith.constant 0 : index
    %2 = vector.load %arg3[%c0_3, %c0_4] : memref<8x1xf32, #tpu.memory_space<vmem>>, vector<8x1xf32>
    %3 = vector.broadcast %2 : vector<8x1xf32> to vector<8x128xf32>
    %4 = arith.mulf %1, %3 : vector<8x128xf32>
    %c0_5 = arith.constant 0 : index
    %c0_6 = arith.constant 0 : index
    %5 = vector.load %arg4[%c0_5, %c0_6] : memref<8x1xf32, #tpu.memory_space<vmem>>, vector<8x1xf32>
    %6 = vector.broadcast %5 : vector<8x1xf32> to vector<8x128xf32>
    %7 = arith.addf %4, %6 : vector<8x128xf32>
    %c0_7 = arith.constant 0 : index
    %c0_8 = arith.constant 0 : index
    %c0_9 = arith.constant 0 : index
    %c0_10 = arith.constant 0 : index
    %8 = vector.load %arg5[%c0_7, %c0_8, %c0_9, %c0_10] : memref<1x1x8x128xf32, #tpu.memory_space<vmem>>, vector<1x1x8x128xf32>
    %9 = vector.shape_cast %8 : vector<1x1x8x128xf32> to vector<8x128xf32>
    %10 = vector.shape_cast %7 : vector<8x128xf32> to vector<1x1x8x128xf32>
    tpu.vector_store %arg5[%c0_7, %c0_8, %c0_9, %c0_10], %10 {strides = array<i32>} : memref<1x1x8x128xf32, #tpu.memory_space<vmem>>, vector<1x1x8x128xf32>,
    return
  }
  func.func @transform_0(%arg0: i32, %arg1: i32) -> (i32, i32, i32, i32) {
    %c0_i32 = arith.constant 0 : i32
    %c0_i32_0 = arith.constant 0 : i32
    %c0_i32_1 = arith.constant 0 : i32
    return %arg0, %arg1, %c0_i32, %c0_i32_0 : i32, i32, i32, i32
  }
  func.func @transform_1(%arg0: i32, %arg1: i32) -> (i32, i32) {
    %c0_i32 = arith.constant 0 : i32
    %c0_i32_0 = arith.constant 0 : i32
    %c0_i32_1 = arith.constant 0 : i32
    return %c0_i32, %c0_i32_0 : i32, i32
  }
  func.func @transform_2(%arg0: i32, %arg1: i32) -> (i32, i32) {
    %c0_i32 = arith.constant 0 : i32
    %c0_i32_0 = arith.constant 0 : i32
    %c0_i32_1 = arith.constant 0 : i32
    return %c0_i32, %c0_i32_0 : i32, i32
  }
  func.func @transform_3(%arg0: i32, %arg1: i32) -> (i32, i32, i32, i32) {
    %c0_i32 = arith.constant 0 : i32
    %c0_i32_0 = arith.constant 0 : i32
    %c0_i32_1 = arith.constant 0 : i32
    return %arg0, %arg1, %c0_i32, %c0_i32_0 : i32, i32, i32, i32
  }
}

</mosaic_0001>

<llo_original>
// kernel: _lambda_.3
$region0: #{_lambda_.3}
  #allocation0 [shape = 'u32[]', space=smem, size = 0x4, offset = 0x4, fixed_abs, tag = 'smem constant byte address 0x4 - core index']
  #allocation1 [shape = 'u32[144,128]{1,0:T(1,128)}', space=vmem, size = 0x12000, scoped, tag = 'internal scratch']
  %s0 = inlined_call_operand.vmem [shape: f32[2,1,8,128], index: 0, kind: input, shape index: {}]
  %s1 = inlined_call_operand.vmem [shape: f32[8,1], index: 1, kind: input, shape index: {}]
  %s2 = inlined_call_operand.vmem [shape: f32[8,1], index: 2, kind: input, shape index: {}]
  %s3 = inlined_call_operand.hbm [shape: f32[2,1,8,128], index: 3, kind: output, shape index: {}]
  %s4 = sld [smem:[#allocation0]]
  $region45: #{_lambda_.3} parent=0
    _
  %s6 = ssub.s32 1, %s4
  %s7 = scalar_select 0, %s6, %s4
  $region1: #{_lambda_.3} parent=0
    #allocation2 [shape = 'u8[8192]{0}', space=vmem, size = 0x2000, scoped, tag = 'output window, operand 0']
    #allocation3 [shape = 's32[2]{0}', space=sflag, size = 0x8, scoped, tag = 'scoped memory for _lambda_.3']
    %8 = vsyncpa [#allocation3], 0
    %s9 = scalar_lea.sflag [#allocation3], 1
    %10 = vsyncpa %s9, 0
    loop: start=0, step=1, limit=4
    $region2: #{_lambda_.3} parent=1 // loop_pre_header
      _
    $region3: #{_lambda_.3} parent=1 // loop_header
      %s12 = sphi 0, %s16
      %p13 = scmp.ge.s32.totalorder %s12, 4
      %s19 = sphi 0, %s31
      %s20 = sphi 0, %s27
      %s21 = sphi 0, %s19
      %s22 = sphi 0, %s20
      %s23 = sphi 0, %s21
      %s24 = sphi 0, %s22
      %s36 = sphi 0, %s38
      %s39 = sphi 0, %s36
      %s40 = sphi 0, %s39
      %s56 = sphi 0, %s40
      %s60 = sphi 0, %s60
      %s62 = sphi 0, %s60
      %s63 = sphi 0, %s62
      %s77 = sphi 0, %s63
      %s81 = sphi 0, %s81
      %s83 = sphi 0, %s81
      %s84 = sphi 0, %s83
      %s98 = sphi 0, %s84
      %s106 = sphi 0, %s108
      %s109 = sphi 0, %s106
      %s110 = sphi 0, %s109
      %s126 = sphi 0, %s110
    $region4: #{_lambda_.3} parent=1 // loop_header_branch
      %15 = sbr.rel (%p13) target = $region8
    $region5: #{_lambda_.3} parent=1 // loop_body
      %s17 = ssub.s32 %s12, 1
      %s18 = ssub.s32 %s12, 2
      %s25 = sadd.s32 1, %s20
      %p26 = scmp.ge.s32.totalorder %s25, 1
      %s27 = scalar_select %p26, 0, %s25
      %s28 = sadd.s32 1, %s19
      %s29 = scalar_select %p26, %s28, %s19
      %p30 = scmp.ge.s32.totalorder %s29, 2
      %s31 = scalar_select %p30, 0, %s29
      %s32 = ssub.s32 %s19, %s31
      %s33 = ssub.s32 %s20, %s27
      %s34 = sor.u32 %s32, %s33
      %p35 = scmp.eq.s32.totalorder %s34, 0
      %s37 = sadd.s32 %s36, 1
      %s38 = scalar_select %p35, %s36, %s37
      %p41 = pneg %p35
      %p42 = scmp.eq.s32.totalorder %s12, 1
      %p43 = por %p41, %p42
      %p44 = scmp.ne.s32.totalorder %s36, %s39
      %p45 = scmp.eq.s32.totalorder %s12, 0
      %p46 = por %p44, %p45
      %p47 = scmp.ne.s32.totalorder %s36, %s39
      %p48 = scmp.eq.s32.totalorder %s17, 1
      %p49 = por %p47, %p48
      %p50 = scmp.ne.s32.totalorder %s39, %s40
      %p51 = scmp.eq.s32.totalorder %s17, 0
      %p52 = por %p50, %p51
      %p53 = scmp.ne.s32.totalorder %s39, %s40
      %p54 = scmp.eq.s32.totalorder %s18, 1
      %p55 = por %p53, %p54
      %p57 = scmp.ne.s32.totalorder %s40, %s56
      %p58 = scmp.eq.s32.totalorder %s18, 0
      %p59 = por %p57, %p58
      %s61 = sadd.s32 %s60, 1
      %p64 = scmp.eq.s32.totalorder %s12, 1
      %p65 = scmp.ne.s32.totalorder %s60, %s62
      %p66 = scmp.eq.s32.totalorder %s12, 0
      %p67 = por %p65, %p66
      %p68 = scmp.ne.s32.totalorder %s60, %s62
      %p69 = scmp.eq.s32.totalorder %s17, 1
      %p70 = por %p68, %p69
      %p71 = scmp.ne.s32.totalorder %s62, %s63
      %p72 = scmp.eq.s32.totalorder %s17, 0
      %p73 = por %p71, %p72
      %p74 = scmp.ne.s32.totalorder %s62, %s63
      %p75 = scmp.eq.s32.totalorder %s18, 1
      %p76 = por %p74, %p75
      %p78 = scmp.ne.s32.totalorder %s63, %s77
      %p79 = scmp.eq.s32.totalorder %s18, 0
      %p80 = por %p78, %p79
      %s82 = sadd.s32 %s81, 1
      %p85 = scmp.eq.s32.totalorder %s12, 1
      %p86 = scmp.ne.s32.totalorder %s81, %s83
      %p87 = scmp.eq.s32.totalorder %s12, 0
      %p88 = por %p86, %p87
      %p89 = scmp.ne.s32.totalorder %s81, %s83
      %p90 = scmp.eq.s32.totalorder %s17, 1
      %p91 = por %p89, %p90
      %p92 = scmp.ne.s32.totalorder %s83, %s84
      %p93 = scmp.eq.s32.totalorder %s17, 0
      %p94 = por %p92, %p93
      %p95 = scmp.ne.s32.totalorder %s83, %s84
      %p96 = scmp.eq.s32.totalorder %s18, 1
      %p97 = por %p95, %p96
      %p99 = scmp.ne.s32.totalorder %s84, %s98
      %p100 = scmp.eq.s32.totalorder %s18, 0
      %p101 = por %p99, %p100
      %s102 = ssub.s32 %s19, %s31
      %s103 = ssub.s32 %s20, %s27
      %s104 = sor.u32 %s102, %s103
      %p105 = scmp.eq.s32.totalorder %s104, 0
      %s107 = sadd.s32 %s106, 1
      %s108 = scalar_select %p105, %s106, %s107
      %p111 = pneg %p105
      %p112 = scmp.eq.s32.totalorder %s12, 1
      %p113 = por %p111, %p112
      %p114 = scmp.ne.s32.totalorder %s106, %s109
      %p115 = scmp.eq.s32.totalorder %s12, 0
      %p116 = por %p114, %p115
      %p117 = scmp.ne.s32.totalorder %s106, %s109
      %p118 = scmp.eq.s32.totalorder %s17, 1
      %p119 = por %p117, %p118
      %p120 = scmp.ne.s32.totalorder %s109, %s110
      %p121 = scmp.eq.s32.totalorder %s17, 0
      %p122 = por %p120, %p121
      %p123 = scmp.ne.s32.totalorder %s109, %s110
      %p124 = scmp.eq.s32.totalorder %s18, 1
      %p125 = por %p123, %p124
      %p127 = scmp.ne.s32.totalorder %s110, %s126
      %p128 = scmp.eq.s32.totalorder %s18, 0
      %p129 = por %p127, %p128
      %p130 = scmp.le.s32.totalorder 1, %s12
      %p131 = scmp.lt.s32.totalorder %s12, 3
      %p132 = pnand %p130, %p131
      %p133 = pneg %p132
      // Predicated region
      $region9: #{_lambda_.3} parent=5 // pred_check
        _
      $region10: #{_lambda_.3} parent=5 // pred_check_branch
        %135 = sbr.rel (%p132) target = $region12
      $region11: #{_lambda_.3} parent=5 // pred_region
        %s136 = ssub.s32 %s12, 1
        // Predicated region
        $region13: #{_lambda_.3} parent=11 // pred_check
          %p137 = pneg %p73
        $region14: #{_lambda_.3} parent=11 // pred_check_branch
          %139 = sbr.rel (%p137) target = $region16
        $region15: #{_lambda_.3} parent=11 // pred_region
          _
        $region16: #{_lambda_.3} parent=11 // pred_fallthru
          _
        // Predicated region
        $region17: #{_lambda_.3} parent=11 // pred_check
          %p140 = pneg %p94
        $region18: #{_lambda_.3} parent=11 // pred_check_branch
          %142 = sbr.rel (%p140) target = $region20
        $region19: #{_lambda_.3} parent=11 // pred_region
          _
        $region20: #{_lambda_.3} parent=11 // pred_fallthru
          _
      $region12: #{_lambda_.3} parent=5 // pred_fallthru
        _
      %p143 = scmp.lt.s32.totalorder %s12, 2
      // Predicated region
      $region21: #{_lambda_.3} parent=5 // pred_check
        %p144 = pneg %p143
      $region22: #{_lambda_.3} parent=5 // pred_check_branch
        %146 = sbr.rel (%p144) target = $region24
      $region23: #{_lambda_.3} parent=5 // pred_region
        // Predicated region
        $region25: #{_lambda_.3} parent=23 // pred_check
          %p147 = pneg %p46
        $region26: #{_lambda_.3} parent=23 // pred_check_branch
          %149 = sbr.rel (%p147) target = $region28
        $region27: #{_lambda_.3} parent=23 // pred_region
          %p150 = scmp.lt.s32.totalorder %s19, 1
          %s151 = scalar_select %p150, %s19, 1
          %p152 = scmp.lt.s32.totalorder %s20, 0
          %s153 = scalar_select %p152, %s20, 0
          %s154 = sadd.s32 %s153, %s151
          %s155 = smul.addr %s154, 8
          %s156 = scalar_lea.vmem %s0, %s155
        $region28: #{_lambda_.3} parent=23 // pred_fallthru
          _
      $region24: #{_lambda_.3} parent=5 // pred_fallthru
        _
      %p157 = scmp.le.s32.totalorder 1, %s12
      %p158 = scmp.lt.s32.totalorder %s12, 3
      %p159 = pnand %p157, %p158
      %p160 = pneg %p159
      // Predicated region
      $region29: #{_lambda_.3} parent=5 // pred_check
        _
      $region30: #{_lambda_.3} parent=5 // pred_check_branch
        %162 = sbr.rel (%p159) target = $region32
      $region31: #{_lambda_.3} parent=5 // pred_region
        %s163 = ssub.s32 %s12, 1
        %p164 = scmp.lt.s32.totalorder %s21, 1
        %s165 = scalar_select %p164, %s21, 1
        %p166 = scmp.lt.s32.totalorder %s22, 0
        %s167 = scalar_select %p166, %s22, 0
        %s168 = sadd.s32 %s167, %s165
        %s169 = smul.addr %s168, 8
        %s170 = scalar_lea.vmem %s0, %s169
        %p171 = pneg %p52
        %p172 = pneg %p49
        %p173 = pneg %p73
        %p174 = pneg %p70
        %p175 = pneg %p94
        %p176 = pneg %p91
        %p177 = pneg %p122
        %p178 = pneg %p119
        %s179 = sand.u32 %s109, 1
        %s180 = scalar_lea.sflag [#allocation3], %s179
        %s181 = sand.u32 %s109, 1
        %s182 = smul.addr %s181, 8
        %s183 = scalar_lea.vmem [#allocation2], %s182
        %p184 = scmp.lt.s32.totalorder %s21, 1
        %s185 = scalar_select %p184, %s21, 1
        %p186 = scmp.lt.s32.totalorder %s22, 0
        %s187 = scalar_select %p186, %s22, 0
        %s188 = sadd.s32 %s187, %s185
        %s189 = smul.addr %s188, 8
        %s190 = scalar_lea.vmem %s0, %s189
        %v191 = vld [vmem:[%s190] sm:$0xff]
        %v192 = vld [vmem:[%s1] sm:$0xff]
        %194 = vset.pattern.permute.xlu0 0
        %195 = vperm.xlu0 %194, %v192
        %v196 = vpop.permute.xlu0 %195
        %v198 = vmul.f32 %v191, %v196
        %v199 = vld [vmem:[%s2] sm:$0xff]
        %201 = vset.pattern.permute.xlu0 0
        %202 = vperm.xlu0 %201, %v199
        %v203 = vpop.permute.xlu0 %202
        %v205 = vadd.f32 %v198, %v203
        %206 = vst [vmem:[%s183] sm:$0xff] %v205
        %s207 = sand.u32 %s109, 1
        %s208 = scalar_lea.sflag [#allocation3], %s207
        %s209 = sand.u32 %s109, 1
        %s210 = smul.addr %s209, 8
        %s211 = scalar_lea.vmem [#allocation2], %s210
        // Predicated region
        $region33: #{_lambda_.3} parent=31 // pred_check
          %p212 = pneg %p119
        $region34: #{_lambda_.3} parent=31 // pred_check_branch
          %214 = sbr.rel (%p212) target = $region36
        $region35: #{_lambda_.3} parent=31 // pred_region
          %s216 = ssub.s32 128, 128
          %217 = vsyncadd %s208, %s216
          %s218 = sadd.s32 %s22, %s21
          %s219 = smul.addr %s218, 128
          %s220 = scalar_lea.hbm %s3, %s219
          %s222 = sshll.u32 %s211, 4
          %s223 = int_to_ptr.vmem [resolvable:$true] %s222
          %225 = dma.vmem_to_hbm [thread:$0]  %s223, 128, %s220, %s208
        $region36: #{_lambda_.3} parent=31 // pred_fallthru
          _
      $region32: #{_lambda_.3} parent=5 // pred_fallthru
        _
      %p226 = scmp.le.s32.totalorder 2, %s12
      // Predicated region
      $region37: #{_lambda_.3} parent=5 // pred_check
        %p227 = pneg %p226
      $region38: #{_lambda_.3} parent=5 // pred_check_branch
        %229 = sbr.rel (%p227) target = $region40
      $region39: #{_lambda_.3} parent=5 // pred_region
        %s230 = ssub.s32 %s12, 2
        // Predicated region
        $region41: #{_lambda_.3} parent=39 // pred_check
          %p231 = pneg %p125
        $region42: #{_lambda_.3} parent=39 // pred_check_branch
          %233 = sbr.rel (%p231) target = $region44
        $region43: #{_lambda_.3} parent=39 // pred_region
          %s234 = sand.u32 %s110, 1
          %s235 = scalar_lea.sflag [#allocation3], %s234
          %s236 = sand.u32 %s110, 1
          %s237 = smul.addr %s236, 8
          %s238 = scalar_lea.vmem [#allocation2], %s237
          %239 = dma.done %s235, 128
        $region44: #{_lambda_.3} parent=39 // pred_fallthru
          _
      $region40: #{_lambda_.3} parent=5 // pred_fallthru
        _
    $region6: #{_lambda_.3} parent=1 // loop_footer
      %s16 = sadd.s32 1, %s12
    $region7: #{_lambda_.3} parent=1 // loop_footer_branch
      %11 = sbr.rel target = $region3
    $region8: #{_lambda_.3} parent=1 // loop_exit
      _
    %240 = vsyncpa [#allocation3], 1
    %s241 = scalar_lea.sflag [#allocation3], 1
    %242 = vsyncpa %s241, 1

// kernel: _lambda_.2
$region0: #{_lambda_.2}
  #allocation0 [shape = 'u32[]', space=smem, size = 0x4, offset = 0x4, fixed_abs, tag = 'smem constant byte address 0x4 - core index']
  #allocation1 [shape = 'u32[144,128]{1,0:T(1,128)}', space=vmem, size = 0x12000, scoped, tag = 'internal scratch']
  %s0 = inlined_call_operand.vmem [shape: f32[2,1,8,132], index: 0, kind: input, shape index: {}]
  %s1 = inlined_call_operand.vmem [shape: f32[8,24], index: 1, kind: input, shape index: {}]
  %s2 = inlined_call_operand.vmem [shape: f32[8,1], index: 2, kind: input, shape index: {}]
  %s3 = inlined_call_operand.vmem [shape: f32[2,1,8,128], index: 3, kind: output, shape index: {0}]
  %s4 = inlined_call_operand.vmem [shape: f32[2,1,8,2], index: 4, kind: output, shape index: {1}]
  %5 = xla_tuple %s3, %s4
  %s6 = sld [smem:[#allocation0]]
  $region53: #{_lambda_.2} parent=0
    _
  %s8 = ssub.s32 1, %s6
  %s9 = scalar_select 0, %s8, %s6
  loop: start=0, step=1, limit=4
  $region2: #{_lambda_.2} parent=0 // loop_pre_header
    _
  $region3: #{_lambda_.2} parent=0 // loop_header
    %s11 = sphi 0, %s15
    %p12 = scmp.ge.s32.totalorder %s11, 4
    %s18 = sphi 0, %s30
    %s19 = sphi 0, %s26
    %s20 = sphi 0, %s18
    %s21 = sphi 0, %s19
    %s22 = sphi 0, %s20
    %s23 = sphi 0, %s21
    %s35 = sphi 0, %s37
    %s38 = sphi 0, %s35
    %s39 = sphi 0, %s38
    %s55 = sphi 0, %s39
    %s59 = sphi 0, %s59
    %s61 = sphi 0, %s59
    %s62 = sphi 0, %s61
    %s76 = sphi 0, %s62
    %s80 = sphi 0, %s80
    %s82 = sphi 0, %s80
    %s83 = sphi 0, %s82
    %s97 = sphi 0, %s83
    %s105 = sphi 0, %s107
    %s108 = sphi 0, %s105
    %s109 = sphi 0, %s108
    %s125 = sphi 0, %s109
    %s133 = sphi 0, %s135
    %s136 = sphi 0, %s133
    %s137 = sphi 0, %s136
    %s153 = sphi 0, %s137
  $region4: #{_lambda_.2} parent=0 // loop_header_branch
    %14 = sbr.rel (%p12) target = $region8
  $region5: #{_lambda_.2} parent=0 // loop_body
    %s16 = ssub.s32 %s11, 1
    %s17 = ssub.s32 %s11, 2
    %s24 = sadd.s32 1, %s19
    %p25 = scmp.ge.s32.totalorder %s24, 1
    %s26 = scalar_select %p25, 0, %s24
    %s27 = sadd.s32 1, %s18
    %s28 = scalar_select %p25, %s27, %s18
    %p29 = scmp.ge.s32.totalorder %s28, 2
    %s30 = scalar_select %p29, 0, %s28
    %s31 = ssub.s32 %s18, %s30
    %s32 = ssub.s32 %s19, %s26
    %s33 = sor.u32 %s31, %s32
    %p34 = scmp.eq.s32.totalorder %s33, 0
    %s36 = sadd.s32 %s35, 1
    %s37 = scalar_select %p34, %s35, %s36
    %p40 = pneg %p34
    %p41 = scmp.eq.s32.totalorder %s11, 1
    %p42 = por %p40, %p41
    %p43 = scmp.ne.s32.totalorder %s35, %s38
    %p44 = scmp.eq.s32.totalorder %s11, 0
    %p45 = por %p43, %p44
    %p46 = scmp.ne.s32.totalorder %s35, %s38
    %p47 = scmp.eq.s32.totalorder %s16, 1
    %p48 = por %p46, %p47
    %p49 = scmp.ne.s32.totalorder %s38, %s39
    %p50 = scmp.eq.s32.totalorder %s16, 0
    %p51 = por %p49, %p50
    %p52 = scmp.ne.s32.totalorder %s38, %s39
    %p53 = scmp.eq.s32.totalorder %s17, 1
    %p54 = por %p52, %p53
    %p56 = scmp.ne.s32.totalorder %s39, %s55
    %p57 = scmp.eq.s32.totalorder %s17, 0
    %p58 = por %p56, %p57
    %s60 = sadd.s32 %s59, 1
    %p63 = scmp.eq.s32.totalorder %s11, 1
    %p64 = scmp.ne.s32.totalorder %s59, %s61
    %p65 = scmp.eq.s32.totalorder %s11, 0
    %p66 = por %p64, %p65
    %p67 = scmp.ne.s32.totalorder %s59, %s61
    %p68 = scmp.eq.s32.totalorder %s16, 1
    %p69 = por %p67, %p68
    %p70 = scmp.ne.s32.totalorder %s61, %s62
    %p71 = scmp.eq.s32.totalorder %s16, 0
    %p72 = por %p70, %p71
    %p73 = scmp.ne.s32.totalorder %s61, %s62
    %p74 = scmp.eq.s32.totalorder %s17, 1
    %p75 = por %p73, %p74
    %p77 = scmp.ne.s32.totalorder %s62, %s76
    %p78 = scmp.eq.s32.totalorder %s17, 0
    %p79 = por %p77, %p78
    %s81 = sadd.s32 %s80, 1
    %p84 = scmp.eq.s32.totalorder %s11, 1
    %p85 = scmp.ne.s32.totalorder %s80, %s82
    %p86 = scmp.eq.s32.totalorder %s11, 0
    %p87 = por %p85, %p86
    %p88 = scmp.ne.s32.totalorder %s80, %s82
    %p89 = scmp.eq.s32.totalorder %s16, 1
    %p90 = por %p88, %p89
    %p91 = scmp.ne.s32.totalorder %s82, %s83
    %p92 = scmp.eq.s32.totalorder %s16, 0
    %p93 = por %p91, %p92
    %p94 = scmp.ne.s32.totalorder %s82, %s83
    %p95 = scmp.eq.s32.totalorder %s17, 1
    %p96 = por %p94, %p95
    %p98 = scmp.ne.s32.totalorder %s83, %s97
    %p99 = scmp.eq.s32.totalorder %s17, 0
    %p100 = por %p98, %p99
    %s101 = ssub.s32 %s18, %s30
    %s102 = ssub.s32 %s19, %s26
    %s103 = sor.u32 %s101, %s102
    %p104 = scmp.eq.s32.totalorder %s103, 0
    %s106 = sadd.s32 %s105, 1
    %s107 = scalar_select %p104, %s105, %s106
    %p110 = pneg %p104
    %p111 = scmp.eq.s32.totalorder %s11, 1
    %p112 = por %p110, %p111
    %p113 = scmp.ne.s32.totalorder %s105, %s108
    %p114 = scmp.eq.s32.totalorder %s11, 0
    %p115 = por %p113, %p114
    %p116 = scmp.ne.s32.totalorder %s105, %s108
    %p117 = scmp.eq.s32.totalorder %s16, 1
    %p118 = por %p116, %p117
    %p119 = scmp.ne.s32.totalorder %s108, %s109
    %p120 = scmp.eq.s32.totalorder %s16, 0
    %p121 = por %p119, %p120
    %p122 = scmp.ne.s32.totalorder %s108, %s109
    %p123 = scmp.eq.s32.totalorder %s17, 1
    %p124 = por %p122, %p123
    %p126 = scmp.ne.s32.totalorder %s109, %s125
    %p127 = scmp.eq.s32.totalorder %s17, 0
    %p128 = por %p126, %p127
    %s129 = ssub.s32 %s18, %s30
    %s130 = ssub.s32 %s19, %s26
    %s131 = sor.u32 %s129, %s130
    %p132 = scmp.eq.s32.totalorder %s131, 0
    %s134 = sadd.s32 %s133, 1
    %s135 = scalar_select %p132, %s133, %s134
    %p138 = pneg %p132
    %p139 = scmp.eq.s32.totalorder %s11, 1
    %p140 = por %p138, %p139
    %p141 = scmp.ne.s32.totalorder %s133, %s136
    %p142 = scmp.eq.s32.totalorder %s11, 0
    %p143 = por %p141, %p142
    %p144 = scmp.ne.s32.totalorder %s133, %s136
    %p145 = scmp.eq.s32.totalorder %s16, 1
    %p146 = por %p144, %p145
    %p147 = scmp.ne.s32.totalorder %s136, %s137
    %p148 = scmp.eq.s32.totalorder %s16, 0
    %p149 = por %p147, %p148
    %p150 = scmp.ne.s32.totalorder %s136, %s137
    %p151 = scmp.eq.s32.totalorder %s17, 1
    %p152 = por %p150, %p151
    %p154 = scmp.ne.s32.totalorder %s137, %s153
    %p155 = scmp.eq.s32.totalorder %s17, 0
    %p156 = por %p154, %p155
    %p157 = scmp.le.s32.totalorder 1, %s11
    %p158 = scmp.lt.s32.totalorder %s11, 3
    %p159 = pnand %p157, %p158
    %p160 = pneg %p159
    // Predicated region
    $region9: #{_lambda_.2} parent=5 // pred_check
      _
    $region10: #{_lambda_.2} parent=5 // pred_check_branch
      %162 = sbr.rel (%p159) target = $region12
    $region11: #{_lambda_.2} parent=5 // pred_region
      %s163 = ssub.s32 %s11, 1
      // Predicated region
      $region13: #{_lambda_.2} parent=11 // pred_check
        %p164 = pneg %p72
      $region14: #{_lambda_.2} parent=11 // pred_check_branch
        %166 = sbr.rel (%p164) target = $region16
      $region15: #{_lambda_.2} parent=11 // pred_region
        _
      $region16: #{_lambda_.2} parent=11 // pred_fallthru
        _
      // Predicated region
      $region17: #{_lambda_.2} parent=11 // pred_check
        %p167 = pneg %p93
      $region18: #{_lambda_.2} parent=11 // pred_check_branch
        %169 = sbr.rel (%p167) target = $region20
      $region19: #{_lambda_.2} parent=11 // pred_region
        _
      $region20: #{_lambda_.2} parent=11 // pred_fallthru
        _
    $region12: #{_lambda_.2} parent=5 // pred_fallthru
      _
    %p170 = scmp.lt.s32.totalorder %s11, 2
    // Predicated region
    $region21: #{_lambda_.2} parent=5 // pred_check
      %p171 = pneg %p170
    $region22: #{_lambda_.2} parent=5 // pred_check_branch
      %173 = sbr.rel (%p171) target = $region24
    $region23: #{_lambda_.2} parent=5 // pred_region
      // Predicated region
      $region25: #{_lambda_.2} parent=23 // pred_check
        %p174 = pneg %p45
      $region26: #{_lambda_.2} parent=23 // pred_check_branch
        %176 = sbr.rel (%p174) target = $region28
      $region27: #{_lambda_.2} parent=23 // pred_region
        %p177 = scmp.lt.s32.totalorder %s18, 1
        %s178 = scalar_select %p177, %s18, 1
        %p179 = scmp.lt.s32.totalorder %s19, 0
        %s180 = scalar_select %p179, %s19, 0
        %s181 = smul.addr %s180, 2
        %s182 = smul.addr %s178, 2
        %s183 = sadd.s32 %s181, %s182
        %s184 = smul.addr %s183, 8
        %s185 = scalar_lea.vmem %s0, %s184
      $region28: #{_lambda_.2} parent=23 // pred_fallthru
        _
    $region24: #{_lambda_.2} parent=5 // pred_fallthru
      _
    %p186 = scmp.le.s32.totalorder 1, %s11
    %p187 = scmp.lt.s32.totalorder %s11, 3
    %p188 = pnand %p186, %p187
    %p189 = pneg %p188
    // Predicated region
    $region29: #{_lambda_.2} parent=5 // pred_check
      _
    $region30: #{_lambda_.2} parent=5 // pred_check_branch
      %191 = sbr.rel (%p188) target = $region32
    $region31: #{_lambda_.2} parent=5 // pred_region
      %s192 = ssub.s32 %s11, 1
      %p193 = scmp.lt.s32.totalorder %s20, 1
      %s194 = scalar_select %p193, %s20, 1
      %p195 = scmp.lt.s32.totalorder %s21, 0
      %s196 = scalar_select %p195, %s21, 0
      %s197 = smul.addr %s196, 2
      %s198 = smul.addr %s194, 2
      %s199 = sadd.s32 %s197, %s198
      %s200 = smul.addr %s199, 8
      %s201 = scalar_lea.vmem %s0, %s200
      %p202 = pneg %p51
      %p203 = pneg %p48
      %p204 = pneg %p72
      %p205 = pneg %p69
      %p206 = pneg %p93
      %p207 = pneg %p90
      %p208 = pneg %p121
      %p209 = pneg %p118
      %p210 = scmp.lt.s32.totalorder %s20, 1
      %s211 = scalar_select %p210, %s20, 1
      %p212 = scmp.lt.s32.totalorder %s21, 0
      %s213 = scalar_select %p212, %s21, 0
      %s214 = sadd.s32 %s213, %s211
      %s215 = smul.addr %s214, 8
      %s216 = scalar_lea.vmem %s3, %s215
      %p217 = pneg %p149
      %p218 = pneg %p146
      %p219 = scmp.lt.s32.totalorder %s20, 1
      %s220 = scalar_select %p219, %s20, 1
      %p221 = scmp.lt.s32.totalorder %s21, 0
      %s222 = scalar_select %p221, %s21, 0
      %s223 = sadd.s32 %s222, %s220
      %s224 = smul.addr %s223, 8
      %s225 = scalar_lea.vmem %s4, %s224
      %p226 = scmp.lt.s32.totalorder %s20, 1
      %s227 = scalar_select %p226, %s20, 1
      %p228 = scmp.lt.s32.totalorder %s21, 0
      %s229 = scalar_select %p228, %s21, 0
      %s230 = smul.addr %s229, 2
      %s231 = smul.addr %s227, 2
      %s232 = sadd.s32 %s230, %s231
      %s233 = smul.addr %s232, 8
      %s234 = scalar_lea.vmem %s0, %s233
      %p235 = scmp.lt.s32.totalorder %s20, 1
      %s236 = scalar_select %p235, %s20, 1
      %p237 = scmp.lt.s32.totalorder %s21, 0
      %s238 = scalar_select %p237, %s21, 0
      %s239 = sadd.s32 %s238, %s236
      %s240 = smul.addr %s239, 8
      %s241 = scalar_lea.vmem %s3, %s240
      %p242 = scmp.lt.s32.totalorder %s20, 1
      %s243 = scalar_select %p242, %s20, 1
      %p244 = scmp.lt.s32.totalorder %s21, 0
      %s245 = scalar_select %p244, %s21, 0
      %s246 = sadd.s32 %s245, %s243
      %s247 = smul.addr %s246, 8
      %s248 = scalar_lea.vmem %s4, %s247
      %v249 = vld [vmem:[%s234] sm:$0xff]
      %v250 = vld [vmem:[%s234 + $0x8] sm:$0xff]
      %253 = vrot.lane.b32.xlu0 %v249, 126
      %v254 = vpop.permute.xlu0 %253
      %255 = vrot.lane.b32.xlu0 %v250, 126
      %v256 = vpop.permute.xlu0 %255
      %vm257 = vcmask 1031168
      %v258 = vsel %vm257, %v254, %v256
      %260 = vrot.lane.b32.xlu0 %v249, 124
      %v261 = vpop.permute.xlu0 %260
      %262 = vrot.lane.b32.xlu0 %v250, 124
      %v263 = vpop.permute.xlu0 %262
      %vm264 = vcmask 1014784
      %v265 = vsel %vm264, %v261, %v263
      %v267 = vld [vmem:[%s1] sm:$0xff]
      %v268 = vld [vmem:[%s2] sm:$0xff]
      %270 = vset.pattern.permute.xlu0 0
      %271 = vperm.xlu0 %270, %v268
      %v272 = vpop.permute.xlu0 %271
      %vm274 = vcmask 195584
      %v276 = vsel %vm274, %v267, 0
      %278 = vmatprep.subr.mxu0 0.0
      %279 = vmatpush1.msra.mxu0 0.0
      %280 = vmatprep.subr.mxu0 0.0
      %281 = vmatpush1.msra.mxu0 0.0
      %282 = vmatprep.subr.mxu0 0.0
      %283 = vmatpush1.msra.mxu0 0.0
      %284 = vmatprep.subr.mxu0 0.0
      %285 = vmatpush1.msra.mxu0 0.0
      %286 = vmatprep.subr.mxu0 0.0
      %287 = vmatpush1.msra.mxu0 0.0
      %288 = vmatprep.subr.mxu0 0.0
      %289 = vmatpush1.msra.mxu0 0.0
      %290 = vmatprep.subr.mxu0 0.0
      %291 = vmatpush1.msra.mxu0 0.0
      %292 = vmatprep.subr.mxu0 0.0
      %293 = vmatpush1.msra.mxu0 0.0
      %294 = vmatprep.subr.mxu0 0.0
      %295 = vmatpush1.msra.mxu0 0.0
      %296 = vmatprep.subr.mxu0 0.0
      %297 = vmatpush1.msra.mxu0 0.0
      %298 = vmatprep.subr.mxu0 0.0
      %299 = vmatpush1.msra.mxu0 0.0
      %300 = vmatprep.subr.mxu0 0.0
      %301 = vmatpush1.msra.mxu0 0.0
      %302 = vmatprep.subr.mxu0 0.0
      %303 = vmatpush1.msra.mxu0 0.0
      %304 = vmatprep.subr.mxu0 0.0
      %305 = vmatpush1.msra.mxu0 %v265
      %306 = vmatprep.subr.mxu0 0.0
      %307 = vmatpush1.msra.mxu0 %v258
      %308 = vmatprep.subr.mxu0 0.0
      %309 = vmatpush1.msra.mxu0 %v249
      %310 = vmatprep.subr.mxu0 0.0
      %311 = vmatpush2.msra.mxu0 0.0
      %312 = vmatprep.subr.mxu0 0.0
      %313 = vmatpush2.msra.mxu0 0.0
      %314 = vmatprep.subr.mxu0 0.0
      %315 = vmatpush2.msra.mxu0 0.0
      %316 = vmatprep.subr.mxu0 0.0
      %317 = vmatpush2.msra.mxu0 0.0
      %318 = vmatprep.subr.mxu0 0.0
      %319 = vmatpush2.msra.mxu0 0.0
      %320 = vmatprep.subr.mxu0 0.0
      %321 = vmatpush2.msra.mxu0 0.0
      %322 = vmatprep.subr.mxu0 0.0
      %323 = vmatpush2.msra.mxu0 0.0
      %324 = vmatprep.subr.mxu0 0.0
      %325 = vmatpush2.msra.mxu0 0.0
      %326 = vmatprep.subr.mxu0 0.0
      %327 = vmatpush2.msra.mxu0 0.0
      %328 = vmatprep.subr.mxu0 0.0
      %329 = vmatpush2.msra.mxu0 0.0
      %330 = vmatprep.subr.mxu0 0.0
      %331 = vmatpush2.msra.mxu0 0.0
      %332 = vmatprep.subr.mxu0 0.0
      %333 = vmatpush2.msra.mxu0 0.0
      %334 = vmatprep.subr.mxu0 0.0
      %335 = vmatpush2.msra.mxu0 0.0
      %336 = vmatprep.subr.mxu0 0.0
      %337 = vmatpush2.msra.mxu0 0.0
      %338 = vmatprep.subr.mxu0 0.0
      %339 = vmatpush2.msra.mxu0 0.0
      %340 = vmatprep.subr.mxu0 0.0
      %341 = vmatpush2.msra.mxu0 0.0
      %342 = vmatprep.mubr.f32.mxu0 0.0
      %343 = vmatmul.mubr.f32.gmra.mxu0 %v276
      %v344 = vpop.f32.mrf.mxu0
      %v345 = vadd.f32 %v272, %v344
      %v346 = vpop.f32.mrf.mxu0
      %347 = vdwg.mxu0
      %v348 = vadd.f32 %v345, %v258
      %v349 = vmul.f32 %v348, 0.2
      %v350 = vmax.f32 %v348, %v349
      %351 = vst [vmem:[%s241] sm:$0xff] %v350
      %352 = vadd.xlane.f32.xlu0 %v350
      %v353 = vpop.xlane.xlu0 %352
      %v354 = vmul.f32 %v350, %v350
      %355 = vadd.xlane.f32.xlu0 %v354
      %v356 = vpop.xlane.xlu0 %355
      %vm357 = vcmask 7168
      %v358 = vsel %vm357, %v353, %v356
      %vm359 = vcmask 15360
      %360 = vst.msk [vmem:[%s248] sm:$0xff] %vm359, %v358
      %p361 = scmp.lt.s32.totalorder %s20, 1
      %s362 = scalar_select %p361, %s20, 1
      %p363 = scmp.lt.s32.totalorder %s21, 0
      %s364 = scalar_select %p363, %s21, 0
      %s365 = sadd.s32 %s364, %s362
      %s366 = smul.addr %s365, 8
      %s367 = scalar_lea.vmem %s3, %s366
      %p368 = scmp.lt.s32.totalorder %s20, 1
      %s369 = scalar_select %p368, %s20, 1
      %p370 = scmp.lt.s32.totalorder %s21, 0
      %s371 = scalar_select %p370, %s21, 0
      %s372 = sadd.s32 %s371, %s369
      %s373 = smul.addr %s372, 8
      %s374 = scalar_lea.vmem %s4, %s373
      // Predicated region
      $region33: #{_lambda_.2} parent=31 // pred_check
        %p375 = pneg %p118
      $region34: #{_lambda_.2} parent=31 // pred_check_branch
        %377 = sbr.rel (%p375) target = $region36
      $region35: #{_lambda_.2} parent=31 // pred_region
        _
      $region36: #{_lambda_.2} parent=31 // pred_fallthru
        _
      // Predicated region
      $region37: #{_lambda_.2} parent=31 // pred_check
        %p378 = pneg %p146
      $region38: #{_lambda_.2} parent=31 // pred_check_branch
        %380 = sbr.rel (%p378) target = $region40
      $region39: #{_lambda_.2} parent=31 // pred_region
        _
      $region40: #{_lambda_.2} parent=31 // pred_fallthru
        _
    $region32: #{_lambda_.2} parent=5 // pred_fallthru
      _
    %p381 = scmp.le.s32.totalorder 2, %s11
    // Predicated region
    $region41: #{_lambda_.2} parent=5 // pred_check
      %p382 = pneg %p381
    $region42: #{_lambda_.2} parent=5 // pred_check_branch
      %384 = sbr.rel (%p382) target = $region44
    $region43: #{_lambda_.2} parent=5 // pred_region
      %s385 = ssub.s32 %s11, 2
      // Predicated region
      $region45: #{_lambda_.2} parent=43 // pred_check
        %p386 = pneg %p124
      $region46: #{_lambda_.2} parent=43 // pred_check_branch
        %388 = sbr.rel (%p386) target = $region48
      $region47: #{_lambda_.2} parent=43 // pred_region
        %p389 = scmp.lt.s32.totalorder %s22, 1
        %s390 = scalar_select %p389, %s22, 1
        %p391 = scmp.lt.s32.totalorder %s23, 0
        %s392 = scalar_select %p391, %s23, 0
        %s393 = sadd.s32 %s392, %s390
        %s394 = smul.addr %s393, 8
        %s395 = scalar_lea.vmem %s3, %s394
      $region48: #{_lambda_.2} parent=43 // pred_fallthru
        _
      // Predicated region
      $region49: #{_lambda_.2} parent=43 // pred_check
        %p396 = pneg %p152
      $region50: #{_lambda_.2} parent=43 // pred_check_branch
        %398 = sbr.rel (%p396) target = $region52
      $region51: #{_lambda_.2} parent=43 // pred_region
        %p399 = scmp.lt.s32.totalorder %s22, 1
        %s400 = scalar_select %p399, %s22, 1
        %p401 = scmp.lt.s32.totalorder %s23, 0
        %s402 = scalar_select %p401, %s23, 0
        %s403 = sadd.s32 %s402, %s400
        %s404 = smul.addr %s403, 8
        %s405 = scalar_lea.vmem %s4, %s404
      $region52: #{_lambda_.2} parent=43 // pred_fallthru
        _
    $region44: #{_lambda_.2} parent=5 // pred_fallthru
      _
  $region6: #{_lambda_.2} parent=0 // loop_footer
    %s15 = sadd.s32 1, %s11
  $region7: #{_lambda_.2} parent=0 // loop_footer_branch
    %10 = sbr.rel target = $region3
  $region8: #{_lambda_.2} parent=0 // loop_exit
    _

</llo_original>
